<compile_context>
chip_gen: v7x
topology: tpu7x:2x2x1
jax: 0.10.0
libtpu: 0.0.40
codegen_flags: <defaults>
</compile_context>

<pallas_src>
import jax
import jax.numpy as jnp
from jax.experimental import pallas as pl
from jax.experimental.pallas import tpu as pltpu

EPS = 1e-5


def _kernel_plain(x_ref, w_ref, b_ref, o_ref):
    # y = w' @ x + b'  (BatchNorm already folded) ; residual is x itself.
    x = x_ref[...]                                              # (C_in, TL)
    y = jnp.dot(w_ref[...], x, preferred_element_type=jnp.float32) + b_ref[...]
    o_ref[...] = jnp.maximum(y + x, 0.0)


def _make_kernel_proj(c_out: int):
    def kernel(x_ref, w_ref, b_ref, o_ref):
        # Fused weight [w2_folded ; wi] gives main path and projected residual
        # in a single MXU matmul; split with static slices.
        x = x_ref[...]                                          # (C_in, TL)
        yy = jnp.dot(w_ref[...], x, preferred_element_type=jnp.float32) + b_ref[...]
        o_ref[...] = jnp.maximum(yy[:c_out] + yy[c_out:], 0.0)
    return kernel


def residual_block_1d(x, params, *, change_input: bool = False, lane_tile: int = 512):
    """x: (N, C_in, L) float32.  params: dict of weights (see init_params).

    lane_tile should be a multiple of 128; keep it modest (<=1024) so the
    double-buffered x/out tiles fit v7x's smaller VMEM as well.
    """
    N, C_in, L = x.shape
    C_out = params["w2"].shape[0]
    assert C_in == C_out, "reference forward requires in_channels == out_channels"

    # ---- fold eval-mode BatchNorm into conv2 (tiny one-time host math) ----
    s2 = params["g2"] * jax.lax.rsqrt(params["v2"] + EPS)           # (C_out, 1)
    w2f = s2 * params["w2"]                                         # (C_out, C_in)
    b2f = s2 * (params["b2"] - params["m2"]) + params["bt2"]        # (C_out, 1)

    if change_input:
        W = jnp.concatenate([w2f, params["wi"]], axis=0)            # (2*C_out, C_in)
        B = jnp.concatenate([b2f, params["bi"]], axis=0)            # (2*C_out, 1)
        kernel = _make_kernel_proj(C_out)
    else:
        W, B = w2f, b2f
        kernel = _kernel_plain
    CW = W.shape[0]

    # ---- lane-dense (C_in, N*L) slab ----
    NL = N * L
    x2d = jnp.transpose(x, (1, 0, 2)).reshape(C_in, NL)

    if NL <= lane_tile:
        TL = NL                        # single full-extent block (always legal)
        NL_pad = NL
    else:
        TL = lane_tile                 # multiple of 128
        NL_pad = pl.cdiv(NL, TL) * TL
        if NL_pad != NL:
            x2d = jnp.pad(x2d, ((0, 0), (0, NL_pad - NL)))

    out2d = pl.pallas_call(
        kernel,
        out_shape=jax.ShapeDtypeStruct((C_out, NL_pad), jnp.float32),
        grid_spec=pltpu.PrefetchScalarGridSpec(
            num_scalar_prefetch=0,
            grid=(NL_pad // TL,),
            in_specs=[
                pl.BlockSpec((C_in, TL), lambda t: (0, t)),   # streamed x tiles
                pl.BlockSpec((CW, C_in), lambda t: (0, 0)),   # resident weights
                pl.BlockSpec((CW, 1), lambda t: (0, 0)),      # resident bias
            ],
            out_specs=pl.BlockSpec((C_out, TL), lambda t: (0, t)),
        ),
        compiler_params=pltpu.CompilerParams(
            dimension_semantics=("parallel",)),
    )(x2d, W, B)

    out2d = out2d[:, :NL]
    return jnp.transpose(out2d.reshape(C_out, N, L), (1, 0, 2))


def init_params(key, in_channels: int, out_channels: int, change_input: bool):
    """Deterministic synthetic parameters matching the PyTorch module shapes.

    Conv1d(k=1) weight (C_out, C_in, 1) is stored as (C_out, C_in); per-channel
    BatchNorm vectors are stored as (C, 1) so they broadcast over L.
    conv1/norm1 params are created for module fidelity but their result is
    discarded by the reference forward, so the kernel never touches them.
    """
    ks = jax.random.split(key, 16)
    f = lambda k, shape: (0.1 * jax.random.normal(k, shape)).astype(jnp.float32)
    p = {
        "w1": f(ks[0], (out_channels, in_channels)),
        "b1": f(ks[1], (out_channels, 1)),
        "g1": 1.0 + f(ks[2], (out_channels, 1)),
        "bt1": f(ks[3], (out_channels, 1)),
        "m1": f(ks[4], (out_channels, 1)),
        "v1": 0.5 + jnp.abs(f(ks[5], (out_channels, 1))),
        "w2": f(ks[6], (out_channels, out_channels)),
        "b2": f(ks[7], (out_channels, 1)),
        "g2": 1.0 + f(ks[8], (out_channels, 1)),
        "bt2": f(ks[9], (out_channels, 1)),
        "m2": f(ks[10], (out_channels, 1)),
        "v2": 0.5 + jnp.abs(f(ks[11], (out_channels, 1))),
    }
    if change_input:
        p["wi"] = f(ks[12], (out_channels, in_channels))
        p["bi"] = f(ks[13], (out_channels, 1))
    return p


def reference(x, p, *, change_input: bool = False):
    """Pure-JAX reference of the PyTorch forward (eval-mode BatchNorm).

    Branch 1 (relu(norm1(conv1(x)))) is computed then discarded by the PyTorch
    forward; in eval mode it has no side effects, so it is omitted here.
    """
    def conv(w, b, t):  # 1x1 conv = per-channel matmul
        return jnp.einsum("oc,ncl->nol", w, t) + b[None]

    def bn(g, bt, m, v, t):
        return g[None] * (t - m[None]) * jax.lax.rsqrt(v[None] + EPS) + bt[None]

    y = bn(p["g2"], p["bt2"], p["m2"], p["v2"], conv(p["w2"], p["b2"], x))
    xr = conv(p["wi"], p["bi"], x) if change_input else x
    return jax.nn.relu(y + xr)


if __name__ == "__main__":
    key = jax.random.PRNGKey(0)
    cases = [
        # (N, C, L, change_input, lane_tile)
        (2, 4, 16, False, 512),   # tiny: single full-extent block
        (2, 4, 16, True, 512),    # with input projection (fused weight)
        (2, 8, 320, True, 512),   # N*L=640 -> padded to 1024, 2 lane tiles
    ]
    for (N, C, L, change_input, lane_tile) in cases:
        key, kx, kp = jax.random.split(key, 3)
        x = jax.random.normal(kx, (N, C, L), dtype=jnp.float32)
        params = init_params(kp, C, C, change_input)

        out = jax.block_until_ready(
            residual_block_1d(x, params, change_input=change_input,
                              lane_tile=lane_tile))
        ref = reference(x, params, change_input=change_input)

        assert out.shape == (N, C, L)
        assert jnp.allclose(out, ref, atol=1e-4, rtol=1e-4), (N, C, L, change_input)
    print("KERNEL_OK")
</pallas_src>

<mosaic_0001>
module attributes {stable_mosaic.version = 11 : i64} {
  func.func @_kernel_plain(%arg0: i32, %arg1: memref<4x32xf32, #tpu.memory_space<vmem>>, %arg2: memref<4x4xf32, #tpu.memory_space<vmem>>, %arg3: memref<4x1xf32, #tpu.memory_space<vmem>>, %arg4: memref<4x32xf32, #tpu.memory_space<vmem>>) attributes {dimension_semantics = [#tpu.dimension_semantics<parallel>], iteration_bounds = array<i64: 1>, scalar_prefetch = 0 : i64, scratch_operands = 0 : i64, tpu.core_type = #tpu.core_type<tc>, window_params = [{transform_indices = @transform_0, window_bounds = array<i64: 4, 32>}, {pipeline_mode = #tpu.pipeline_mode<synchronous>, transform_indices = @transform_1, window_bounds = array<i64: 4, 4>}, {pipeline_mode = #tpu.pipeline_mode<synchronous>, transform_indices = @transform_2, window_bounds = array<i64: 4, 1>}, {transform_indices = @transform_3, window_bounds = array<i64: 4, 32>}]} {
    %c0 = arith.constant 0 : index
    %c0_0 = arith.constant 0 : index
    %0 = vector.load %arg1[%c0, %c0_0] : memref<4x32xf32, #tpu.memory_space<vmem>>, vector<4x32xf32>
    %c0_1 = arith.constant 0 : index
    %c0_2 = arith.constant 0 : index
    %1 = vector.load %arg2[%c0_1, %c0_2] : memref<4x4xf32, #tpu.memory_space<vmem>>, vector<4x4xf32>
    %cst = arith.constant dense<0.000000e+00> : vector<4x32xf32>
    %2 = tpu.matmul %1, %0, %cst {dimension_numbers = #tpu.dot_dimension_numbers<[1], [0], [0], [1], [0, 0, 1, 1], [], []>} : vector<4x4xf32>, vector<4x32xf32>, vector<4x32xf32> -> vector<4x32xf32>
    %c0_3 = arith.constant 0 : index
    %c0_4 = arith.constant 0 : index
    %3 = vector.load %arg3[%c0_3, %c0_4] : memref<4x1xf32, #tpu.memory_space<vmem>>, vector<4x1xf32>
    %4 = vector.broadcast %3 : vector<4x1xf32> to vector<4x32xf32>
    %5 = arith.addf %2, %4 : vector<4x32xf32>
    %6 = arith.addf %5, %0 : vector<4x32xf32>
    %cst_5 = arith.constant 0.000000e+00 : f32
    %7 = vector.broadcast %cst_5 : f32 to vector<4x32xf32>
    %8 = arith.maximumf %6, %7 : vector<4x32xf32>
    %c0_6 = arith.constant 0 : index
    %c0_7 = arith.constant 0 : index
    %9 = vector.load %arg4[%c0_6, %c0_7] : memref<4x32xf32, #tpu.memory_space<vmem>>, vector<4x32xf32>
    tpu.vector_store %arg4[%c0_6, %c0_7], %8 {strides = array<i32>} : memref<4x32xf32, #tpu.memory_space<vmem>>, vector<4x32xf32>,
    return
  }
  func.func @transform_0(%arg0: i32) -> (i32, i32) {
    %c0_i32 = arith.constant 0 : i32
    %c0_i32_0 = arith.constant 0 : i32
    return %c0_i32, %arg0 : i32, i32
  }
  func.func @transform_1(%arg0: i32) -> (i32, i32) {
    %c0_i32 = arith.constant 0 : i32
    %c0_i32_0 = arith.constant 0 : i32
    %c0_i32_1 = arith.constant 0 : i32
    return %c0_i32, %c0_i32_0 : i32, i32
  }
  func.func @transform_2(%arg0: i32) -> (i32, i32) {
    %c0_i32 = arith.constant 0 : i32
    %c0_i32_0 = arith.constant 0 : i32
    %c0_i32_1 = arith.constant 0 : i32
    return %c0_i32, %c0_i32_0 : i32, i32
  }
  func.func @transform_3(%arg0: i32) -> (i32, i32) {
    %c0_i32 = arith.constant 0 : i32
    %c0_i32_0 = arith.constant 0 : i32
    return %c0_i32, %arg0 : i32, i32
  }
}

</mosaic_0001>

<llo_original>
// kernel: tpu_custom_call.1
$region0: #{tpu_custom_call.1}
  #allocation0 [shape = 'u32[]', space=smem, size = 0x4, offset = 0x4, fixed_abs, tag = 'smem constant byte address 0x4 - core index']
  #allocation1 [shape = 'u32[144,128]{1,0:T(1,128)}', space=vmem, size = 0x12000, scoped, tag = 'internal scratch']
  %s0 = inlined_call_operand.vmem [shape: f32[4,32], index: 0, kind: input, shape index: {}]
  %s1 = inlined_call_operand.vmem [shape: f32[4,4], index: 1, kind: input, shape index: {}]
  %s2 = inlined_call_operand.vmem [shape: f32[4,1], index: 2, kind: input, shape index: {}]
  %s3 = inlined_call_operand.hbm [shape: f32[4,32], index: 3, kind: output, shape index: {}]
  %s4 = sld [smem:[#allocation0]]
  $region22: #{tpu_custom_call.1} parent=0
    _
  %s6 = ssub.s32 1, %s4
  %s7 = scalar_select 0, %s6, %s4
  $region1: #{tpu_custom_call.1} parent=0
    #allocation2 [shape = 'u8[2048]{0}', space=vmem, size = 0x800, scoped, tag = 'output window, operand 0, single buffered']
    #allocation3 [shape = 's32[1]{0}', space=sflag, size = 0x4, scoped, tag = 'scoped memory for tpu_custom_call.1']
    %8 = vsyncpa [#allocation3], 0
    // Predicated region
    $region2: #{tpu_custom_call.1} parent=1 // pred_check
      _
    $region3: #{tpu_custom_call.1} parent=1 // pred_check_branch
      %10 = sbr.rel (0) target = $region5
    $region4: #{tpu_custom_call.1} parent=1 // pred_region
      _
    $region5: #{tpu_custom_call.1} parent=1 // pred_fallthru
      _
    // Predicated region
    $region6: #{tpu_custom_call.1} parent=1 // pred_check
      _
    $region7: #{tpu_custom_call.1} parent=1 // pred_check_branch
      %12 = sbr.rel (0) target = $region9
    $region8: #{tpu_custom_call.1} parent=1 // pred_region
      _
    $region9: #{tpu_custom_call.1} parent=1 // pred_fallthru
      _
    // Predicated region
    $region10: #{tpu_custom_call.1} parent=1 // pred_check
      _
    $region11: #{tpu_custom_call.1} parent=1 // pred_check_branch
      %14 = sbr.rel (0) target = $region13
    $region12: #{tpu_custom_call.1} parent=1 // pred_region
      _
    $region13: #{tpu_custom_call.1} parent=1 // pred_fallthru
      _
    %v15 = vld [vmem:[%s0] sm:$0xf]
    %v16 = vld [vmem:[%s1] sm:$0xf]
    %v17 = vld [vmem:[%s2] sm:$0xf]
    %19 = vset.pattern.permute.xlu0 0
    %20 = vperm.xlu0 %19, %v17
    %v21 = vpop.permute.xlu0 %20
    %vm23 = vcmask 31744
    %v25 = vsel %vm23, %v16, 0
    %vm27 = vcmask 1043456
    %v29 = vsel %vm27, %v15, 0
    %31 = vmatprep.subr.mxu0 0.0
    %32 = vmatpush1.msra.mxu0 %v29
    %33 = vmatprep.subr.mxu0 0.0
    %34 = vmatpush1.msra.mxu0 0.0
    %35 = vmatprep.subr.mxu0 0.0
    %36 = vmatpush1.msra.mxu0 0.0
    %37 = vmatprep.subr.mxu0 0.0
    %38 = vmatpush1.msra.mxu0 0.0
    %39 = vmatprep.subr.mxu0 0.0
    %40 = vmatpush1.msra.mxu0 0.0
    %41 = vmatprep.subr.mxu0 0.0
    %42 = vmatpush1.msra.mxu0 0.0
    %43 = vmatprep.subr.mxu0 0.0
    %44 = vmatpush1.msra.mxu0 0.0
    %45 = vmatprep.subr.mxu0 0.0
    %46 = vmatpush1.msra.mxu0 0.0
    %47 = vmatprep.subr.mxu0 0.0
    %48 = vmatpush1.msra.mxu0 0.0
    %49 = vmatprep.subr.mxu0 0.0
    %50 = vmatpush1.msra.mxu0 0.0
    %51 = vmatprep.subr.mxu0 0.0
    %52 = vmatpush1.msra.mxu0 0.0
    %53 = vmatprep.subr.mxu0 0.0
    %54 = vmatpush1.msra.mxu0 0.0
    %55 = vmatprep.subr.mxu0 0.0
    %56 = vmatpush1.msra.mxu0 0.0
    %57 = vmatprep.subr.mxu0 0.0
    %58 = vmatpush1.msra.mxu0 0.0
    %59 = vmatprep.subr.mxu0 0.0
    %60 = vmatpush1.msra.mxu0 0.0
    %61 = vmatprep.subr.mxu0 0.0
    %62 = vmatpush1.msra.mxu0 0.0
    %63 = vmatprep.subr.mxu0 0.0
    %64 = vmatpush1.msra.mxu0 0.0
    %65 = vmatprep.subr.mxu0 0.0
    %66 = vmatpush1.msra.mxu0 0.0
    %67 = vmatprep.subr.mxu0 0.0
    %68 = vmatpush1.msra.mxu0 0.0
    %69 = vmatprep.subr.mxu0 0.0
    %70 = vmatpush1.msra.mxu0 0.0
    %71 = vmatprep.subr.mxu0 0.0
    %72 = vmatpush1.msra.mxu0 0.0
    %73 = vmatprep.subr.mxu0 0.0
    %74 = vmatpush1.msra.mxu0 0.0
    %75 = vmatprep.subr.mxu0 0.0
    %76 = vmatpush1.msra.mxu0 0.0
    %77 = vmatprep.subr.mxu0 0.0
    %78 = vmatpush1.msra.mxu0 0.0
    %79 = vmatprep.subr.mxu0 0.0
    %80 = vmatpush1.msra.mxu0 0.0
    %81 = vmatprep.subr.mxu0 0.0
    %82 = vmatpush1.msra.mxu0 0.0
    %83 = vmatprep.subr.mxu0 0.0
    %84 = vmatpush1.msra.mxu0 0.0
    %85 = vmatprep.subr.mxu0 0.0
    %86 = vmatpush1.msra.mxu0 0.0
    %87 = vmatprep.subr.mxu0 0.0
    %88 = vmatpush1.msra.mxu0 0.0
    %89 = vmatprep.subr.mxu0 0.0
    %90 = vmatpush1.msra.mxu0 0.0
    %91 = vmatprep.subr.mxu0 0.0
    %92 = vmatpush1.msra.mxu0 0.0
    %93 = vmatprep.subr.mxu0 0.0
    %94 = vmatpush1.msra.mxu0 0.0
    %95 = vmatprep.mubr.f32.mxu0 0.0
    %96 = vmatmul.mubr.f32.gmra.mrb[0].mxu0 %v25
    %v97 = vpop.f32.mrb[0].mxu0
    %v98 = vadd.f32 %v21, %v97
    %v99 = vpop.f32.mrb[0].mxu0
    %100 = vdwg.mxu0
    %v101 = vadd.f32 %v98, %v15
    %v102 = vmax.f32 %v101, 0.0
    %vm103 = vcmask 257024
    %104 = vst.msk [vmem:[#allocation2] sm:$0xf] %vm103, %v102
    // Predicated region
    $region14: #{tpu_custom_call.1} parent=1 // pred_check
      _
    $region15: #{tpu_custom_call.1} parent=1 // pred_check_branch
      %106 = sbr.rel (0) target = $region17
    $region16: #{tpu_custom_call.1} parent=1 // pred_region
      %s108 = ssub.s32 64, 64
      %109 = vsyncadd [#allocation3], %s108
      %s111 = sshll.u32 [#allocation2], 4
      %s112 = int_to_ptr.vmem [resolvable:$true] %s111
      %114 = dma.vmem_to_hbm [thread:$0]  %s112, 64, %s3, [#allocation3]
    $region17: #{tpu_custom_call.1} parent=1 // pred_fallthru
      _
    // Predicated region
    $region18: #{tpu_custom_call.1} parent=1 // pred_check
      _
    $region19: #{tpu_custom_call.1} parent=1 // pred_check_branch
      %116 = sbr.rel (0) target = $region21
    $region20: #{tpu_custom_call.1} parent=1 // pred_region
      %117 = dma.done [#allocation3], 64
    $region21: #{tpu_custom_call.1} parent=1 // pred_fallthru
      _
    %118 = vsyncpa [#allocation3], 1

</llo_original>
